<compile_context>
chip_gen: v7x
topology: tpu7x:2x2x1
jax: 0.10.0
libtpu: 0.0.40
codegen_flags: <defaults>
</compile_context>

<pallas_src>
import functools

import jax
import jax.numpy as jnp
from jax.experimental import pallas as pl
from jax.experimental.pallas import tpu as pltpu

ALPHA = 1.0
GAMMA = 2.0  # compile-time 2.0 -> implemented as an explicit square in the kernel

_VMEM_LIMIT_BYTES = 48 * 1024 * 1024   # above the 16/32 MiB scoped defaults, < v7x 64 MiB phys
_DEFAULT_BLOCK_BYTES = 4 * 1024 * 1024  # per logits block (Pallas double-buffers -> ~8 MiB)


def _finalize(out_ref, n_total):
    # out_ref currently holds sum over all samples of per-sample CE, shape (1, 1).
    ce_mean = out_ref[...] * jnp.float32(1.0 / n_total)
    pt = jnp.exp(-ce_mean)
    one_minus_pt = 1.0 - pt
    out_ref[...] = ALPHA * one_minus_pt * one_minus_pt * ce_mean  # gamma == 2.0


def _focal_loss_row_kernel(logits_ref, targets_ref, out_ref, *, n_total):
    # logits_ref: (TN, C), targets_ref: (TN, 1) int32, out_ref: (1, 1) f32 (resident).
    i = pl.program_id(0)

    @pl.when(i == 0)
    def _():
        out_ref[...] = jnp.zeros_like(out_ref)

    x = logits_ref[...].astype(jnp.float32)                # (TN, C)
    t = targets_ref[...]                                   # (TN, 1) int32
    tn, c = x.shape

    # Numerically-stable log-sum-exp along the class (lane) axis.
    m = jnp.max(x, axis=-1, keepdims=True)                                   # (TN, 1)
    lse = m + jnp.log(jnp.sum(jnp.exp(x - m), axis=-1, keepdims=True))       # (TN, 1)

    # Gather target logits via one-hot mask over the class axis.
    class_ids = jax.lax.broadcasted_iota(jnp.int32, (tn, c), 1)
    target_logit = jnp.sum(jnp.where(class_ids == t, x, 0.0), axis=-1, keepdims=True)

    ce = lse - target_logit                                                  # (TN, 1)

    # Mask padded rows of the (possibly ragged) last tile against global N.
    row_ids = i * tn + jax.lax.broadcasted_iota(jnp.int32, (tn, 1), 0)
    ce = jnp.where(row_ids < n_total, ce, 0.0)

    out_ref[...] += jnp.sum(ce, keepdims=True)                               # (1, 1)

    @pl.when(i == pl.num_programs(0) - 1)
    def _():
        _finalize(out_ref, n_total)


def _focal_loss_lane_kernel(logits_ref, targets_ref, out_ref, *, n_total):
    # Transposed layout for small C: logits_ref: (C, TN) with samples on the lane axis,
    # targets_ref: (1, TN) int32, out_ref: (1, 1) f32 (resident).
    i = pl.program_id(0)

    @pl.when(i == 0)
    def _():
        out_ref[...] = jnp.zeros_like(out_ref)

    x = logits_ref[...].astype(jnp.float32)                # (C, TN)
    t = targets_ref[...]                                   # (1, TN) int32
    c, tn = x.shape

    # Class reductions run along the sublane axis; all TN lanes stay live.
    m = jnp.max(x, axis=0, keepdims=True)                                    # (1, TN)
    lse = m + jnp.log(jnp.sum(jnp.exp(x - m), axis=0, keepdims=True))        # (1, TN)

    class_ids = jax.lax.broadcasted_iota(jnp.int32, (c, tn), 0)
    target_logit = jnp.sum(jnp.where(class_ids == t, x, 0.0), axis=0, keepdims=True)

    ce = lse - target_logit                                                  # (1, TN)

    # Mask padded lanes of the (possibly ragged) last tile against global N.
    col_ids = i * tn + jax.lax.broadcasted_iota(jnp.int32, (1, tn), 1)
    ce = jnp.where(col_ids < n_total, ce, 0.0)

    out_ref[...] += jnp.sum(ce, keepdims=True)                               # (1, 1)

    @pl.when(i == pl.num_programs(0) - 1)
    def _():
        _finalize(out_ref, n_total)


def focal_loss(logits, targets, *, block_bytes=_DEFAULT_BLOCK_BYTES):
    """logits: (N, C) float (f32 or bf16) logits; targets: (N,) int class indices."""
    n, c = logits.shape
    itemsize = jnp.dtype(logits.dtype).itemsize

    # Small class counts: put samples on the 128-lane axis for full VPU/EUP/XLU usage.
    lane_dense = c < 128
    granule = 128 if lane_dense else 8

    # Largest sample-tile whose logits block stays within the per-block byte budget.
    tn = (block_bytes // (c * itemsize)) // granule * granule
    tn = max(granule, tn)
    if n <= tn:
        tn = n  # single full block along the sample axis (exempt from the (8,128) rule)
    num_tiles = pl.cdiv(n, tn)

    if lane_dense:
        logits_in = logits.T                                    # (C, N)
        targets_in = targets.reshape(1, n).astype(jnp.int32)    # lane-dense targets
        kernel = functools.partial(_focal_loss_lane_kernel, n_total=n)
        in_specs = [
            pl.BlockSpec((c, tn), lambda i: (0, i)),
            pl.BlockSpec((1, tn), lambda i: (0, i)),
        ]
    else:
        logits_in = logits
        targets_in = targets.reshape(n, 1).astype(jnp.int32)
        kernel = functools.partial(_focal_loss_row_kernel, n_total=n)
        in_specs = [
            pl.BlockSpec((tn, c), lambda i: (i, 0)),
            pl.BlockSpec((tn, 1), lambda i: (i, 0)),
        ]

    out = pl.pallas_call(
        kernel,
        out_shape=jax.ShapeDtypeStruct((1, 1), jnp.float32),
        grid_spec=pltpu.PrefetchScalarGridSpec(
            num_scalar_prefetch=0,
            grid=(num_tiles,),
            in_specs=in_specs,
            # Same output block across all grid steps -> resident accumulator,
            # written back to HBM once after the final step.
            out_specs=pl.BlockSpec((1, 1), lambda i: (0, 0)),
        ),
        compiler_params=pltpu.CompilerParams(
            dimension_semantics=("arbitrary",),     # accumulation axis
            vmem_limit_bytes=_VMEM_LIMIT_BYTES,
        ),
    )(logits_in, targets_in)
    return out[0, 0]


def focal_loss_ref(logits, targets):
    # Pure-JAX reference with the same (PyTorch FocalLoss) semantics.
    logp = jax.nn.log_softmax(logits.astype(jnp.float32), axis=-1)
    ce = -jnp.mean(jnp.take_along_axis(logp, targets[:, None], axis=-1))
    pt = jnp.exp(-ce)
    return ALPHA * (1.0 - pt) ** GAMMA * ce


if __name__ == "__main__":
    base_key = jax.random.PRNGKey(0)

    def check(n, c, dtype=jnp.float32, block_bytes=_DEFAULT_BLOCK_BYTES):
        k1, k2 = jax.random.split(jax.random.fold_in(base_key, n * 1000 + c))
        logits = jax.random.normal(k1, (n, c), dtype=jnp.float32).astype(dtype)
        targets = jax.random.randint(k2, (n,), 0, c, dtype=jnp.int32)
        out = jax.block_until_ready(focal_loss(logits, targets, block_bytes=block_bytes))
        ref = focal_loss_ref(logits, targets)
        assert jnp.allclose(out, ref, atol=2e-5, rtol=2e-5), (n, c, out, ref)

    # Small shapes consistent with the module: batch=8, classes=32 (lane-dense path).
    check(8, 32)
    # Multi-tile lane-dense path with a ragged last tile (tiny block forces 3 tiles).
    check(300, 32, block_bytes=32 * 128 * 4)
    # Row-tiled path (C >= 128) with a ragged last tile (tiny block forces 7 tiles).
    check(50, 256, block_bytes=8 * 256 * 4)
    # bf16 logits accepted at the HBM boundary; cast to f32 inside the kernel.
    check(8, 32, dtype=jnp.bfloat16)

    print("KERNEL_OK")
</pallas_src>

<mosaic_0001>
module attributes {stable_mosaic.version = 11 : i64} {
  func.func @_focal_loss_lane_kernel(%arg0: i32, %arg1: memref<32x8xf32, #tpu.memory_space<vmem>>, %arg2: memref<1x8xi32, #tpu.memory_space<vmem>>, %arg3: memref<1x1xf32, #tpu.memory_space<vmem>>) attributes {dimension_semantics = [#tpu.dimension_semantics<arbitrary>], iteration_bounds = array<i64: 1>, scalar_prefetch = 0 : i64, scratch_operands = 0 : i64, tpu.core_type = #tpu.core_type<tc>, window_params = [{transform_indices = @transform_0, window_bounds = array<i64: 32, 8>}, {transform_indices = @transform_1, window_bounds = array<i64: 1, 8>}, {pipeline_mode = #tpu.pipeline_mode<synchronous>, transform_indices = @transform_2, window_bounds = array<i64: 1, 1>}]} {
    %c0_i32 = arith.constant 0 : i32
    %0 = arith.cmpi eq, %arg0, %c0_i32 : i32
    %1 = arith.extui %0 : i1 to i32
    %c0_i32_0 = arith.constant 0 : i32
    %2 = arith.cmpi ne, %1, %c0_i32_0 : i32
    scf.if %2 {
      %cst_16 = arith.constant 0.000000e+00 : f32
      %41 = vector.broadcast %cst_16 : f32 to vector<1x1xf32>
      %c0_17 = arith.constant 0 : index
      %c0_18 = arith.constant 0 : index
      %42 = vector.load %arg3[%c0_17, %c0_18] : memref<1x1xf32, #tpu.memory_space<vmem>>, vector<1x1xf32>
      tpu.vector_store %arg3[%c0_17, %c0_18], %41 {strides = array<i32>} : memref<1x1xf32, #tpu.memory_space<vmem>>, vector<1x1xf32>,
    } else {
    }
    %c0 = arith.constant 0 : index
    %c0_1 = arith.constant 0 : index
    %3 = vector.load %arg1[%c0, %c0_1] : memref<32x8xf32, #tpu.memory_space<vmem>>, vector<32x8xf32>
    %c0_2 = arith.constant 0 : index
    %c0_3 = arith.constant 0 : index
    %4 = vector.load %arg2[%c0_2, %c0_3] : memref<1x8xi32, #tpu.memory_space<vmem>>, vector<1x8xi32>
    %cst = arith.constant dense<0xFF800000> : vector<8xf32>
    %5 = vector.multi_reduction <maximumf>, %3, %cst [0] : vector<32x8xf32> to vector<8xf32>
    %6 = vector.shape_cast %5 : vector<8xf32> to vector<1x8xf32>
    %7 = vector.broadcast %6 : vector<1x8xf32> to vector<32x8xf32>
    %8 = arith.subf %3, %7 : vector<32x8xf32>
    %9 = math.exp %8 : vector<32x8xf32>
    %cst_4 = arith.constant dense<0.000000e+00> : vector<8xf32>
    %10 = vector.multi_reduction <add>, %9, %cst_4 [0] : vector<32x8xf32> to vector<8xf32>
    %11 = vector.shape_cast %10 : vector<8xf32> to vector<1x8xf32>
    %12 = math.log %11 : vector<1x8xf32>
    %13 = arith.addf %6, %12 : vector<1x8xf32>
    %14 = tpu.iota {dimensions = array<i32: 0>} : vector<32x8xi32>
    %15 = vector.broadcast %4 : vector<1x8xi32> to vector<32x8xi32>
    %16 = arith.cmpi eq, %14, %15 : vector<32x8xi32>
    %cst_5 = arith.constant 0.000000e+00 : f32
    %17 = vector.broadcast %cst_5 : f32 to vector<32x8xf32>
    %18 = arith.select %16, %3, %17 : vector<32x8xi1>, vector<32x8xf32>
    %cst_6 = arith.constant dense<0.000000e+00> : vector<8xf32>
    %19 = vector.multi_reduction <add>, %18, %cst_6 [0] : vector<32x8xf32> to vector<8xf32>
    %20 = vector.shape_cast %19 : vector<8xf32> to vector<1x8xf32>
    %21 = arith.subf %13, %20 : vector<1x8xf32>
    %c8_i32 = arith.constant 8 : i32
    %22 = arith.muli %arg0, %c8_i32 : i32
    %23 = tpu.iota {dimensions = array<i32: 1>} : vector<1x8xi32>
    %24 = vector.broadcast %22 : i32 to vector<1x8xi32>
    %25 = arith.addi %24, %23 : vector<1x8xi32>
    %c8_i32_7 = arith.constant 8 : i32
    %26 = vector.broadcast %c8_i32_7 : i32 to vector<1x8xi32>
    %27 = arith.cmpi slt, %25, %26 : vector<1x8xi32>
    %cst_8 = arith.constant 0.000000e+00 : f32
    %28 = vector.broadcast %cst_8 : f32 to vector<1x8xf32>
    %29 = arith.select %27, %21, %28 : vector<1x8xi1>, vector<1x8xf32>
    %c0_9 = arith.constant 0 : index
    %c0_10 = arith.constant 0 : index
    %30 = vector.load %arg3[%c0_9, %c0_10] : memref<1x1xf32, #tpu.memory_space<vmem>>, vector<1x1xf32>
    %31 = vector.shape_cast %29 : vector<1x8xf32> to vector<1x1x8xf32>
    %cst_11 = arith.constant dense<0.000000e+00> : vector<1xf32>
    %32 = vector.multi_reduction <add>, %31, %cst_11 [1, 2] : vector<1x1x8xf32> to vector<1xf32>
    %33 = vector.shape_cast %32 : vector<1xf32> to vector<1x1x1xf32>
    %34 = vector.extract %33[0, 0, 0] : f32 from vector<1x1x1xf32>
    %35 = vector.broadcast %34 : f32 to vector<1x1xf32>
    %36 = arith.addf %30, %35 : vector<1x1xf32>
    %c0_12 = arith.constant 0 : index
    %c0_13 = arith.constant 0 : index
    %37 = vector.load %arg3[%c0_12, %c0_13] : memref<1x1xf32, #tpu.memory_space<vmem>>, vector<1x1xf32>
    tpu.vector_store %arg3[%c0_12, %c0_13], %36 {strides = array<i32>} : memref<1x1xf32, #tpu.memory_space<vmem>>, vector<1x1xf32>,
    %c0_i32_14 = arith.constant 0 : i32
    %38 = arith.cmpi eq, %arg0, %c0_i32_14 : i32
    %39 = arith.extui %38 : i1 to i32
    %c0_i32_15 = arith.constant 0 : i32
    %40 = arith.cmpi ne, %39, %c0_i32_15 : i32
    scf.if %40 {
      %c0_16 = arith.constant 0 : index
      %c0_17 = arith.constant 0 : index
      %41 = vector.load %arg3[%c0_16, %c0_17] : memref<1x1xf32, #tpu.memory_space<vmem>>, vector<1x1xf32>
      %cst_18 = arith.constant 1.250000e-01 : f32
      %42 = vector.broadcast %cst_18 : f32 to vector<1x1xf32>
      %43 = arith.mulf %41, %42 : vector<1x1xf32>
      %cst_19 = arith.constant 0.000000e+00 : f32
      %44 = vector.broadcast %cst_19 : f32 to vector<1x1xf32>
      %45 = arith.subf %44, %43 : vector<1x1xf32>
      %46 = math.exp %45 : vector<1x1xf32>
      %cst_20 = arith.constant 1.000000e+00 : f32
      %47 = vector.broadcast %cst_20 : f32 to vector<1x1xf32>
      %48 = arith.subf %47, %46 : vector<1x1xf32>
      %cst_21 = arith.constant 1.000000e+00 : f32
      %49 = vector.broadcast %cst_21 : f32 to vector<1x1xf32>
      %50 = arith.mulf %49, %48 : vector<1x1xf32>
      %51 = arith.mulf %50, %48 : vector<1x1xf32>
      %52 = arith.mulf %51, %43 : vector<1x1xf32>
      %c0_22 = arith.constant 0 : index
      %c0_23 = arith.constant 0 : index
      %53 = vector.load %arg3[%c0_22, %c0_23] : memref<1x1xf32, #tpu.memory_space<vmem>>, vector<1x1xf32>
      tpu.vector_store %arg3[%c0_22, %c0_23], %52 {strides = array<i32>} : memref<1x1xf32, #tpu.memory_space<vmem>>, vector<1x1xf32>,
    } else {
    }
    return
  }
  func.func @transform_0(%arg0: i32) -> (i32, i32) {
    %c0_i32 = arith.constant 0 : i32
    %c0_i32_0 = arith.constant 0 : i32
    return %c0_i32, %arg0 : i32, i32
  }
  func.func @transform_1(%arg0: i32) -> (i32, i32) {
    %c0_i32 = arith.constant 0 : i32
    %c0_i32_0 = arith.constant 0 : i32
    return %c0_i32, %arg0 : i32, i32
  }
  func.func @transform_2(%arg0: i32) -> (i32, i32) {
    %c0_i32 = arith.constant 0 : i32
    %c0_i32_0 = arith.constant 0 : i32
    %c0_i32_1 = arith.constant 0 : i32
    return %c0_i32, %c0_i32_0 : i32, i32
  }
}

</mosaic_0001>

<llo_original>
// kernel: tpu_custom_call.1
$region0: #{tpu_custom_call.1}
  #allocation0 [shape = 'u32[]', space=smem, size = 0x4, offset = 0x4, fixed_abs, tag = 'smem constant byte address 0x4 - core index']
  #allocation1 [shape = 'u32[144,128]{1,0:T(1,128)}', space=vmem, size = 0x12000, scoped, tag = 'internal scratch']
  %s0 = inlined_call_operand.vmem [shape: f32[32,8], index: 0, kind: input, shape index: {}]
  %s1 = inlined_call_operand.vmem [shape: s32[1,8], index: 1, kind: input, shape index: {}]
  %s2 = inlined_call_operand.hbm [shape: f32[1,1], index: 2, kind: output, shape index: {}]
  %s3 = sld [smem:[#allocation0]]
  $region26: #{tpu_custom_call.1} parent=0
    _
  %s5 = ssub.s32 1, %s3
  %s6 = scalar_select 0, %s5, %s3
  $region1: #{tpu_custom_call.1} parent=0
    #allocation2 [shape = 'u8[512]{0}', space=vmem, size = 0x400, scoped, tag = 'output window, operand 0, single buffered']
    #allocation3 [shape = 's32[1]{0}', space=sflag, size = 0x4, scoped, tag = 'scoped memory for tpu_custom_call.1']
    %7 = vsyncpa [#allocation3], 0
    // Predicated region
    $region2: #{tpu_custom_call.1} parent=1 // pred_check
      _
    $region3: #{tpu_custom_call.1} parent=1 // pred_check_branch
      %9 = sbr.rel (0) target = $region5
    $region4: #{tpu_custom_call.1} parent=1 // pred_region
      _
    $region5: #{tpu_custom_call.1} parent=1 // pred_fallthru
      _
    // Predicated region
    $region6: #{tpu_custom_call.1} parent=1 // pred_check
      _
    $region7: #{tpu_custom_call.1} parent=1 // pred_check_branch
      %11 = sbr.rel (0) target = $region9
    $region8: #{tpu_custom_call.1} parent=1 // pred_region
      _
    $region9: #{tpu_custom_call.1} parent=1 // pred_fallthru
      _
    %p12 = scmp.eq.s32.totalorder 0, 0
    // Predicated region
    $region10: #{tpu_custom_call.1} parent=1 // pred_check
      %p13 = pneg %p12
    $region11: #{tpu_custom_call.1} parent=1 // pred_check_branch
      %15 = sbr.rel (%p13) target = $region13
    $region12: #{tpu_custom_call.1} parent=1 // pred_region
      %vm16 = vcmask 0
      %17 = vst.msk [vmem:[#allocation2] sm:$0x1] %vm16, 0.0
    $region13: #{tpu_custom_call.1} parent=1 // pred_fallthru
      _
    %v18 = vld [vmem:[%s0] sm:$0xff]
    %v19 = vld [vmem:[%s0 + $0x8] sm:$0xff]
    %v20 = vld [vmem:[%s0 + $0x10] sm:$0xff]
    %v21 = vld [vmem:[%s0 + $0x18] sm:$0xff]
    %v22 = vld [vmem:[%s1] sm:$0x1]
    %vm23 = vcmask 64512
    %v24 = vsel %vm23, %v18, -inf
    %v25 = vsel %vm23, %v19, -inf
    %v26 = vsel %vm23, %v20, -inf
    %v27 = vsel %vm23, %v21, -inf
    %v28 = vmax.f32 %v24, %v25
    %v29 = vmax.f32 %v26, %v27
    %v30 = vmax.f32 %v28, %v29
    %v31 = vrot.slane %v30, 4
    %v32 = vmax.f32 %v30, %v31
    %v33 = vrot.slane %v32, 2
    %v34 = vmax.f32 %v32, %v33
    %v35 = vrot.slane %v34, 1
    %v36 = vmax.f32 %v34, %v35
    %v37 = vsub.f32 %v18, %v36
    %v38 = vsub.f32 %v19, %v36
    %v39 = vsub.f32 %v20, %v36
    %v40 = vsub.f32 %v21, %v36
    %v41 = vmul.f32 %v37, 1.442695
    %v42 = vpow.pop %v41
    %v43 = vmul.f32 %v38, 1.442695
    %v44 = vpow.pop %v43
    %v45 = vmul.f32 %v39, 1.442695
    %v46 = vpow.pop %v45
    %v47 = vmul.f32 %v40, 1.442695
    %v48 = vpow.pop %v47
    %v49 = vsel %vm23, %v42, 0.0
    %v50 = vsel %vm23, %v44, 0.0
    %v51 = vadd.f32 %v49, %v50
    %v52 = vsel %vm23, %v46, 0.0
    %v53 = vadd.f32 %v51, %v52
    %v54 = vsel %vm23, %v48, 0.0
    %v55 = vadd.f32 %v53, %v54
    %v56 = vrot.slane %v55, 4
    %v57 = vadd.f32 %v55, %v56
    %v58 = vrot.slane %v57, 2
    %v59 = vadd.f32 %v57, %v58
    %v60 = vrot.slane %v59, 1
    %v61 = vadd.f32 %v59, %v60
    %v62 = vlog2.pop %v61
    %v63 = vmul.f32 %v62, 0.6931472
    %v64 = vadd.f32 %v36, %v63
    %v65 = vlaneseq
    %v66 = vshrl.u32 %v65, 7
    %v67 = vadd.s32 %v66, 8
    %v68 = vadd.s32 %v66, 16
    %v69 = vadd.s32 %v66, 24
    %v70 = vlaneseq
    %v71 = vshrl.u32 %v70, 7
    %v72 = vsub.s32 0, %v71
    %v73 = vrot.slane %v22, %v72
    %vm74 = vcmp.eq.s32.totalorder %v66, %v73
    %vm75 = vcmp.eq.s32.totalorder %v67, %v73
    %vm76 = vcmp.eq.s32.totalorder %v68, %v73
    %vm77 = vcmp.eq.s32.totalorder %v69, %v73
    %v78 = vsel %vm74, %v18, 0.0
    %v79 = vsel %vm75, %v19, 0.0
    %v80 = vsel %vm76, %v20, 0.0
    %v81 = vsel %vm77, %v21, 0.0
    %v82 = vsel %vm23, %v78, 0.0
    %v83 = vsel %vm23, %v79, 0.0
    %v84 = vadd.f32 %v82, %v83
    %v85 = vsel %vm23, %v80, 0.0
    %v86 = vadd.f32 %v84, %v85
    %v87 = vsel %vm23, %v81, 0.0
    %v88 = vadd.f32 %v86, %v87
    %v89 = vrot.slane %v88, 4
    %v90 = vadd.f32 %v88, %v89
    %v91 = vrot.slane %v90, 2
    %v92 = vadd.f32 %v90, %v91
    %v93 = vrot.slane %v92, 1
    %v94 = vadd.f32 %v92, %v93
    %v95 = vsub.f32 %v64, %v94
    %s96 = smul.u32 0, 8
    %v97 = vlaneseq
    %v98 = vand.u32 %v97, 127
    %v99 = vstv %s96
    %v100 = vadd.s32 %v99, %v98
    %vm101 = vcmp.lt.s32.totalorder %v100, 8
    %v102 = vsel %vm101, %v95, 0.0
    %v103 = vld [vmem:[#allocation2] sm:$0x1]
    %vm104 = vcmask 57344
    %v105 = vsel %vm104, %v102, 0.0
    %106 = vadd.xlane.f32.xlu0 %v105
    %v107 = vpop.xlane.xlu0 %106
    %v108 = vrot.slane %v107, 4
    %v109 = vadd.f32 %v107, %v108
    %v110 = vrot.slane %v109, 2
    %v111 = vadd.f32 %v109, %v110
    %v112 = vrot.slane %v111, 1
    %v113 = vadd.f32 %v111, %v112
    %s114 = vtos %v113
    %v115 = vstv %s114
    %v116 = vadd.f32 %v103, %v115
    %vm117 = vcmask 0
    %118 = vst.msk [vmem:[#allocation2] sm:$0x1] %vm117, %v116
    // Predicated region
    $region14: #{tpu_custom_call.1} parent=1 // pred_check
      %p119 = pneg %p12
    $region15: #{tpu_custom_call.1} parent=1 // pred_check_branch
      %121 = sbr.rel (%p119) target = $region17
    $region16: #{tpu_custom_call.1} parent=1 // pred_region
      %v122 = vld [vmem:[#allocation2] sm:$0x1]
      %v123 = vmul.f32 %v122, 0.125
      %v124 = vsub.f32 0.0, %v123
      %v125 = vmul.f32 %v124, 1.442695
      %v126 = vpow.pop %v125
      %v127 = vsub.f32 1.0, %v126
      %v128 = vmul.f32 %v127, %v127
      %v129 = vmul.f32 %v128, %v123
      %130 = vst.msk [vmem:[#allocation2] sm:$0x1] %vm117, %v129
    $region17: #{tpu_custom_call.1} parent=1 // pred_fallthru
      _
    // Predicated region
    $region18: #{tpu_custom_call.1} parent=1 // pred_check
      _
    $region19: #{tpu_custom_call.1} parent=1 // pred_check_branch
      %132 = sbr.rel (0) target = $region21
    $region20: #{tpu_custom_call.1} parent=1 // pred_region
      %s134 = ssub.s32 16, 16
      %135 = vsyncadd [#allocation3], %s134
      %s137 = sshll.u32 [#allocation2], 4
      %s138 = int_to_ptr.vmem [resolvable:$true] %s137
      %140 = dma.vmem_to_hbm [thread:$0]  %s138, 16, %s2, [#allocation3]
    $region21: #{tpu_custom_call.1} parent=1 // pred_fallthru
      _
    // Predicated region
    $region22: #{tpu_custom_call.1} parent=1 // pred_check
      _
    $region23: #{tpu_custom_call.1} parent=1 // pred_check_branch
      %142 = sbr.rel (0) target = $region25
    $region24: #{tpu_custom_call.1} parent=1 // pred_region
      %143 = dma.done [#allocation3], 16
    $region25: #{tpu_custom_call.1} parent=1 // pred_fallthru
      _
    %144 = vsyncpa [#allocation3], 1

</llo_original>
